<compile_context>
chip_gen: v7x
topology: tpu7x:2x2x1
jax: 0.10.0
libtpu: 0.0.40
codegen_flags: <defaults>
</compile_context>

<pallas_src>
import functools
import math

import jax
import jax.numpy as jnp
from jax.experimental import pallas as pl
from jax.experimental.pallas import tpu as pltpu


def _vmem_capacity_bytes():
    """Physical per-core VMEM (128 MiB on v5e/v6e, 64 MiB on v7x).

    Falls back to the most conservative value (64 MiB) if the query is
    unavailable; that fallback is safe on every generation.
    """
    cap = 64 * 1024 * 1024
    try:
        info = pltpu.get_tpu_info()
        queried = getattr(info, "vmem_capacity_bytes", None)
        if queried:
            cap = int(queried)
    except Exception:
        pass
    return cap


def _block_footprint_bytes(b, S, C, itemsize):
    """VMEM working-set estimate for a (b, S, C) block.

    Includes double-buffered I/O, the f32 scores/exp intermediates, the bf16
    P copy fed to the PV matmul, the f32 PV accumulator, the softmax row
    stats, and a 1.3x fudge for compiler temporaries / relayouts.
    """
    io = 2 * 4 * b * S * C * itemsize      # double-buffered q, k, v, out blocks
    scores = b * S * S * 4                 # f32 scores
    expm = b * S * S * 4                   # f32 exp(scores - m)
    p_bf16 = b * S * S * 2                 # bf16 P for the PV matmul
    pv = b * S * C * 4                     # f32 PV accumulator
    stats = 4 * b * S * 4                  # m, l, reciprocal broadcasts
    return int(1.3 * (io + scores + expm + p_bf16 + pv + stats))


def _choose_block_bh(bh, S, C, itemsize, budget_bytes):
    """Batch-heads per grid step.

    Largest block whose working set fits the generation-aware budget; among
    fitting sizes prefer ones leaving >= 4 grid steps (2 per v7x TensorCore,
    keeps the pipeline double-buffered), then >= 2, then the largest fit.
    When C is lane-sparse (< 128) the block is snapped to a multiple of 8 so
    the lane-dense 2-D output layout stays legal.
    """
    per_bh = max(1, _block_footprint_bytes(1, S, C, itemsize))
    b_fit = max(1, min(bh, budget_bytes // per_bh))

    def _snap(b):
        if C % 128 != 0 and b >= 8:
            return (b // 8) * 8
        return b

    for min_steps in (4, 2):
        b = _snap(min(b_fit, bh // min_steps))
        if b >= 1:
            return b
    return max(1, _snap(b_fit))


def _attention_kernel(q_ref, k_ref, v_ref, o_ref, *, flatten_out):
    # One grid step handles a (B_BLK, S, C) slab of batch-heads.
    q = q_ref[...]
    k = k_ref[...]
    v = v_ref[...]
    b, s, c = q.shape

    # 1/sqrt(C) folded into Q (S*C elements, not S*S scores), applied in f32
    # before any bf16 cast so the scale itself is not quantized.
    qs = q.astype(jnp.float32) * (1.0 / math.sqrt(c))

    # MXU operands in bf16 (native on v5e/v6e/v7x) with f32 accumulation.
    mxu_dt = jnp.bfloat16 if q.dtype == jnp.float32 else q.dtype

    # scores = (Q/sqrt(C)) K^T, contracting the last dims (no transpose copy).
    scores = jnp.einsum(
        "bqc,bkc->bqk", qs.astype(mxu_dt), k.astype(mxu_dt),
        preferred_element_type=jnp.float32)                    # (b, S, S) f32

    # Numerically stable softmax; exp/sum in f32 (v5e has no bf16 EUP/VPU),
    # normalization deferred past the PV matmul.
    m = jnp.max(scores, axis=-1, keepdims=True)
    e = jnp.exp(scores - m)                                    # (b, S, S) f32
    l = jnp.sum(e, axis=-1, keepdims=True)                     # (b, S, 1)  f32

    # Unnormalized P @ V on the MXU (bf16 operands, f32 accumulate), then
    # normalize with an EUP approximate reciprocal (separate slot, ~free).
    pv = jnp.einsum(
        "bqk,bkc->bqc", e.astype(mxu_dt), v.astype(mxu_dt),
        preferred_element_type=jnp.float32)                    # (b, S, C) f32
    out = (pv * pl.reciprocal(l, approx=True)).astype(o_ref.dtype)

    if flatten_out:
        # Lane-dense store: (b, S*C) with S*C a multiple of 128 avoids the
        # masked vst.msk partial stores a narrow (C < 128) last dim causes.
        o_ref[...] = out.reshape(b, s * c)
    else:
        o_ref[...] = out


def attention(query, key, value):
    """Scaled dot-product attention (no mask), identical to the PyTorch module.

    query, key, value: (..., S, C) with matching shapes.
    Returns: (..., S, C), same dtype as query.
    """
    assert query.shape == key.shape == value.shape
    *lead, S, C = query.shape
    bh = 1
    for d in lead:
        bh *= d
    bh = max(bh, 1)

    qf = query.reshape(bh, S, C)
    kf = key.reshape(bh, S, C)
    vf = value.reshape(bh, S, C)

    itemsize = jnp.dtype(query.dtype).itemsize
    cap = _vmem_capacity_bytes()
    budget = int(0.6 * cap)      # ~77 MiB on v5e/v6e, ~38 MiB on v7x
    b_blk = _choose_block_bh(bh, S, C, itemsize, budget)

    # Pad batch-heads so awkward (e.g. prime) counts don't force b_blk == 1;
    # padded rows produce garbage that is sliced off below (no NaNs: zero
    # scores give a uniform softmax over zero values).
    n_steps = (bh + b_blk - 1) // b_blk
    bh_pad = b_blk * n_steps
    if bh_pad > bh:
        pad = ((0, bh_pad - bh), (0, 0), (0, 0))
        qf = jnp.pad(qf, pad)
        kf = jnp.pad(kf, pad)
        vf = jnp.pad(vf, pad)

    # Lane-dense output layout when C is lane-sparse (< 128) and the block
    # shape stays legal ((8,128)-friendly or full-extent dims).
    lane_dense = (
        C % 128 != 0
        and (S * C) % 128 == 0
        and (b_blk % 8 == 0 or b_blk == bh_pad)
    )

    fp = _block_footprint_bytes(b_blk, S, C, itemsize)
    # Scoped VMEM limit: raised above the 16/32 MiB defaults when needed,
    # capped at 0.75x physical so v7x (64 MiB) keeps headroom for Mosaic
    # internal scratch.
    vmem_limit = int(min(0.75 * cap, max(32 * 1024 * 1024, 1.2 * fp)))

    in_block = pl.BlockSpec((b_blk, S, C), lambda i: (i, 0, 0))
    if lane_dense:
        out_shape = jax.ShapeDtypeStruct((bh_pad, S * C), query.dtype)
        out_block = pl.BlockSpec((b_blk, S * C), lambda i: (i, 0))
    else:
        out_shape = jax.ShapeDtypeStruct((bh_pad, S, C), query.dtype)
        out_block = pl.BlockSpec((b_blk, S, C), lambda i: (i, 0, 0))

    out = pl.pallas_call(
        functools.partial(_attention_kernel, flatten_out=lane_dense),
        out_shape=out_shape,
        grid_spec=pltpu.PrefetchScalarGridSpec(
            num_scalar_prefetch=0,
            grid=(n_steps,),
            in_specs=[in_block, in_block, in_block],
            out_specs=out_block,
        ),
        compiler_params=pltpu.CompilerParams(
            dimension_semantics=("parallel",),
            vmem_limit_bytes=vmem_limit,
        ),
    )(qf, kf, vf)

    out = out.reshape(bh_pad, S, C)[:bh]
    return out.reshape(*lead, S, C) if lead else out.reshape(S, C)


def _attention_ref(query, key, value):
    c = query.shape[-1]
    scores = jnp.einsum("...qc,...kc->...qk", query, key,
                        precision="highest") / math.sqrt(c)
    probs = jax.nn.softmax(scores, axis=-1)
    return jnp.einsum("...qk,...kc->...qc", probs, value, precision="highest")


if __name__ == "__main__":
    root = jax.random.PRNGKey(0)

    def _run_check(shape, key, tol=3e-2):
        kq, kk, kv = jax.random.split(key, 3)
        q = jax.random.normal(kq, shape, dtype=jnp.float32)
        k = jax.random.normal(kk, shape, dtype=jnp.float32)
        v = jax.random.normal(kv, shape, dtype=jnp.float32)
        out = attention(q, k, v)
        jax.block_until_ready(out)
        ref = _attention_ref(q, k, v)
        assert out.shape == ref.shape
        # bf16 MXU operands (f32 accumulation) + approx reciprocal give ~1e-2
        # worst-case normalized error; budget 3e-2.
        err = float(jnp.max(jnp.abs(out.astype(jnp.float32) - ref))
                    / (jnp.max(jnp.abs(ref)) + 1e-12))
        assert err < tol, f"mismatch vs reference for {shape}: err={err}"

    keys = jax.random.split(root, 3)
    # (batch=2, heads=4, seq=8, hidden=32): matches module usage (3-D out path).
    _run_check((2, 4, 8, 32), keys[0])
    # Larger batch-head count: exercises the lane-dense (b, S*C) output path.
    _run_check((8, 8, 16, 32), keys[1])
    # Non-divisible batch-head count: exercises the zero-pad + slice path.
    _run_check((9, 8, 32), keys[2])

    print("KERNEL_OK")
</pallas_src>

<mosaic_0001>
module attributes {stable_mosaic.version = 11 : i64} {
  func.func @_attention_kernel(%arg0: i32, %arg1: memref<2x8x32xf32, #tpu.memory_space<vmem>>, %arg2: memref<2x8x32xf32, #tpu.memory_space<vmem>>, %arg3: memref<2x8x32xf32, #tpu.memory_space<vmem>>, %arg4: memref<2x8x32xf32, #tpu.memory_space<vmem>>) attributes {dimension_semantics = [#tpu.dimension_semantics<parallel>], iteration_bounds = array<i64: 4>, scalar_prefetch = 0 : i64, scratch_operands = 0 : i64, tpu.core_type = #tpu.core_type<tc>, window_params = [{transform_indices = @transform_0, window_bounds = array<i64: 2, 8, 32>}, {transform_indices = @transform_1, window_bounds = array<i64: 2, 8, 32>}, {transform_indices = @transform_2, window_bounds = array<i64: 2, 8, 32>}, {transform_indices = @transform_3, window_bounds = array<i64: 2, 8, 32>}]} {
    %c0 = arith.constant 0 : index
    %c0_0 = arith.constant 0 : index
    %c0_1 = arith.constant 0 : index
    %0 = vector.load %arg1[%c0, %c0_0, %c0_1] : memref<2x8x32xf32, #tpu.memory_space<vmem>>, vector<2x8x32xf32>
    %c0_2 = arith.constant 0 : index
    %c0_3 = arith.constant 0 : index
    %c0_4 = arith.constant 0 : index
    %1 = vector.load %arg2[%c0_2, %c0_3, %c0_4] : memref<2x8x32xf32, #tpu.memory_space<vmem>>, vector<2x8x32xf32>
    %c0_5 = arith.constant 0 : index
    %c0_6 = arith.constant 0 : index
    %c0_7 = arith.constant 0 : index
    %2 = vector.load %arg3[%c0_5, %c0_6, %c0_7] : memref<2x8x32xf32, #tpu.memory_space<vmem>>, vector<2x8x32xf32>
    %cst = arith.constant 0.176776692 : f32
    %3 = vector.broadcast %cst : f32 to vector<2x8x32xf32>
    %4 = arith.mulf %0, %3 : vector<2x8x32xf32>
    %5 = arith.truncf %4 : vector<2x8x32xf32> to vector<2x8x32xbf16>
    %6 = arith.truncf %1 : vector<2x8x32xf32> to vector<2x8x32xbf16>
    "tpu.trace_start"() <{level = 10 : i32, message = "bqc,bkc->bqk"}> : () -> ()
    %cst_8 = arith.constant dense<0.000000e+00> : vector<2x8x8xf32>
    %7 = tpu.matmul %5, %6, %cst_8 {dimension_numbers = #tpu.dot_dimension_numbers<[2], [2], [1], [1], [0, 0, 0, 1, 1, 1], [0], [0]>} : vector<2x8x32xbf16>, vector<2x8x32xbf16>, vector<2x8x8xf32> -> vector<2x8x8xf32>
    "tpu.trace_stop"() : () -> ()
    %cst_9 = arith.constant dense<0xFF800000> : vector<2x8xf32>
    %8 = vector.multi_reduction <maximumf>, %7, %cst_9 [2] : vector<2x8x8xf32> to vector<2x8xf32>
    %9 = vector.shape_cast %8 : vector<2x8xf32> to vector<2x8x1xf32>
    %10 = vector.broadcast %9 : vector<2x8x1xf32> to vector<2x8x8xf32>
    %11 = arith.subf %7, %10 : vector<2x8x8xf32>
    %12 = math.exp %11 : vector<2x8x8xf32>
    %cst_10 = arith.constant dense<0.000000e+00> : vector<2x8xf32>
    %13 = vector.multi_reduction <add>, %12, %cst_10 [2] : vector<2x8x8xf32> to vector<2x8xf32>
    %14 = vector.shape_cast %13 : vector<2x8xf32> to vector<2x8x1xf32>
    %15 = arith.truncf %12 : vector<2x8x8xf32> to vector<2x8x8xbf16>
    %16 = arith.truncf %2 : vector<2x8x32xf32> to vector<2x8x32xbf16>
    "tpu.trace_start"() <{level = 10 : i32, message = "bqk,bkc->bqc"}> : () -> ()
    %cst_11 = arith.constant dense<0.000000e+00> : vector<2x8x32xf32>
    %17 = tpu.matmul %15, %16, %cst_11 {dimension_numbers = #tpu.dot_dimension_numbers<[2], [1], [1], [2], [0, 0, 0, 1, 1, 2], [0], [0]>} : vector<2x8x8xbf16>, vector<2x8x32xbf16>, vector<2x8x32xf32> -> vector<2x8x32xf32>
    "tpu.trace_stop"() : () -> ()
    %18 = tpu.reciprocal %14 {approx = true} : vector<2x8x1xf32> -> vector<2x8x1xf32>
    %19 = vector.broadcast %18 : vector<2x8x1xf32> to vector<2x8x32xf32>
    %20 = arith.mulf %17, %19 : vector<2x8x32xf32>
    %c0_12 = arith.constant 0 : index
    %c0_13 = arith.constant 0 : index
    %c0_14 = arith.constant 0 : index
    %21 = vector.load %arg4[%c0_12, %c0_13, %c0_14] : memref<2x8x32xf32, #tpu.memory_space<vmem>>, vector<2x8x32xf32>
    tpu.vector_store %arg4[%c0_12, %c0_13, %c0_14], %20 {strides = array<i32>} : memref<2x8x32xf32, #tpu.memory_space<vmem>>, vector<2x8x32xf32>,
    return
  }
  func.func @transform_0(%arg0: i32) -> (i32, i32, i32) {
    %c0_i32 = arith.constant 0 : i32
    %c0_i32_0 = arith.constant 0 : i32
    %c0_i32_1 = arith.constant 0 : i32
    return %arg0, %c0_i32, %c0_i32_0 : i32, i32, i32
  }
  func.func @transform_1(%arg0: i32) -> (i32, i32, i32) {
    %c0_i32 = arith.constant 0 : i32
    %c0_i32_0 = arith.constant 0 : i32
    %c0_i32_1 = arith.constant 0 : i32
    return %arg0, %c0_i32, %c0_i32_0 : i32, i32, i32
  }
  func.func @transform_2(%arg0: i32) -> (i32, i32, i32) {
    %c0_i32 = arith.constant 0 : i32
    %c0_i32_0 = arith.constant 0 : i32
    %c0_i32_1 = arith.constant 0 : i32
    return %arg0, %c0_i32, %c0_i32_0 : i32, i32, i32
  }
  func.func @transform_3(%arg0: i32) -> (i32, i32, i32) {
    %c0_i32 = arith.constant 0 : i32
    %c0_i32_0 = arith.constant 0 : i32
    %c0_i32_1 = arith.constant 0 : i32
    return %arg0, %c0_i32, %c0_i32_0 : i32, i32, i32
  }
}

</mosaic_0001>

<llo_original>
// kernel: tpu_custom_call.1
$region0: #{tpu_custom_call.1}
  #allocation0 [shape = 'u32[]', space=smem, size = 0x4, offset = 0x4, fixed_abs, tag = 'smem constant byte address 0x4 - core index']
  #allocation1 [shape = 'u32[144,128]{1,0:T(1,128)}', space=vmem, size = 0x12000, scoped, tag = 'internal scratch']
  %s0 = inlined_call_operand.hbm [shape: f32[8,8,32], index: 0, kind: input, shape index: {}]
  %s1 = inlined_call_operand.hbm [shape: f32[8,8,32], index: 1, kind: input, shape index: {}]
  %s2 = inlined_call_operand.hbm [shape: f32[8,8,32], index: 2, kind: input, shape index: {}]
  %s3 = inlined_call_operand.hbm [shape: f32[8,8,32], index: 3, kind: output, shape index: {}]
  %s4 = sld [smem:[#allocation0]]
  $region57: #{tpu_custom_call.1} parent=0
    _
  %s6 = ssub.s32 1, %s4
  %s7 = scalar_select 0, %s6, %s4
  $region1: #{tpu_custom_call.1} parent=0
    #allocation2 [shape = 'u8[16384]{0}', space=vmem, size = 0x4000, scoped, tag = 'input window, operand 0']
    #allocation3 [shape = 's32[2]{0}', space=sflag, size = 0x8, scoped, tag = 'scoped memory for tpu_custom_call.1']
    #allocation4 [shape = 's32[2]{0}', space=sflag, size = 0x8, scoped, tag = 'scoped memory for tpu_custom_call.1']
    #allocation5 [shape = 'u8[16384]{0}', space=vmem, size = 0x4000, scoped, tag = 'input window, operand 1']
    #allocation6 [shape = 's32[2]{0}', space=sflag, size = 0x8, scoped, tag = 'scoped memory for tpu_custom_call.1']
    #allocation7 [shape = 'u8[16384]{0}', space=vmem, size = 0x4000, scoped, tag = 'input window, operand 2']
    #allocation8 [shape = 'u8[16384]{0}', space=vmem, size = 0x4000, scoped, tag = 'output window, operand 0']
    %8 = vsyncpa [#allocation3], 0
    %s9 = scalar_lea.sflag [#allocation3], 1
    %10 = vsyncpa %s9, 0
    %11 = vsyncpa [#allocation6], 0
    %s12 = scalar_lea.sflag [#allocation6], 1
    %13 = vsyncpa %s12, 0
    %14 = vsyncpa [#allocation4], 0
    %s15 = scalar_lea.sflag [#allocation4], 1
    %16 = vsyncpa %s15, 0
    loop: start=0, step=1, limit=6
    $region2: #{tpu_custom_call.1} parent=1 // loop_pre_header
      _
    $region3: #{tpu_custom_call.1} parent=1 // loop_header
      %s18 = sphi 0, %s22
      %p19 = scmp.ge.s32.totalorder %s18, 6
      %s28 = sphi 0, %s30
      %s31 = sphi 0, %s28
      %s32 = sphi 0, %s31
      %s48 = sphi 0, %s32
      %s54 = sphi 0, %s56
      %s57 = sphi 0, %s54
      %s58 = sphi 0, %s57
      %s74 = sphi 0, %s58
      %s80 = sphi 0, %s82
      %s83 = sphi 0, %s80
      %s84 = sphi 0, %s83
      %s100 = sphi 0, %s84
      %s106 = sphi 0, %s108
      %s109 = sphi 0, %s106
      %s110 = sphi 0, %s109
      %s126 = sphi 0, %s110
    $region4: #{tpu_custom_call.1} parent=1 // loop_header_branch
      %21 = sbr.rel (%p19) target = $region8
    $region5: #{tpu_custom_call.1} parent=1 // loop_body
      %s23 = ssub.s32 %s18, 1
      %s24 = ssub.s32 %s18, 2
      %s25 = sadd.s32 %s18, 1
      %s26 = ssub.s32 %s18, %s25
      %p27 = scmp.eq.s32.totalorder %s26, 0
      %s29 = sadd.s32 %s28, 1
      %s30 = scalar_select %p27, %s28, %s29
      %p33 = pneg %p27
      %p34 = scmp.eq.s32.totalorder %s18, 3
      %p35 = por %p33, %p34
      %p36 = scmp.ne.s32.totalorder %s28, %s31
      %p37 = scmp.eq.s32.totalorder %s18, 0
      %p38 = por %p36, %p37
      %p39 = scmp.ne.s32.totalorder %s28, %s31
      %p40 = scmp.eq.s32.totalorder %s23, 3
      %p41 = por %p39, %p40
      %p42 = scmp.ne.s32.totalorder %s31, %s32
      %p43 = scmp.eq.s32.totalorder %s23, 0
      %p44 = por %p42, %p43
      %p45 = scmp.ne.s32.totalorder %s31, %s32
      %p46 = scmp.eq.s32.totalorder %s24, 3
      %p47 = por %p45, %p46
      %p49 = scmp.ne.s32.totalorder %s32, %s48
      %p50 = scmp.eq.s32.totalorder %s24, 0
      %p51 = por %p49, %p50
      %s52 = ssub.s32 %s18, %s25
      %p53 = scmp.eq.s32.totalorder %s52, 0
      %s55 = sadd.s32 %s54, 1
      %s56 = scalar_select %p53, %s54, %s55
      %p59 = pneg %p53
      %p60 = scmp.eq.s32.totalorder %s18, 3
      %p61 = por %p59, %p60
      %p62 = scmp.ne.s32.totalorder %s54, %s57
      %p63 = scmp.eq.s32.totalorder %s18, 0
      %p64 = por %p62, %p63
      %p65 = scmp.ne.s32.totalorder %s54, %s57
      %p66 = scmp.eq.s32.totalorder %s23, 3
      %p67 = por %p65, %p66
      %p68 = scmp.ne.s32.totalorder %s57, %s58
      %p69 = scmp.eq.s32.totalorder %s23, 0
      %p70 = por %p68, %p69
      %p71 = scmp.ne.s32.totalorder %s57, %s58
      %p72 = scmp.eq.s32.totalorder %s24, 3
      %p73 = por %p71, %p72
      %p75 = scmp.ne.s32.totalorder %s58, %s74
      %p76 = scmp.eq.s32.totalorder %s24, 0
      %p77 = por %p75, %p76
      %s78 = ssub.s32 %s18, %s25
      %p79 = scmp.eq.s32.totalorder %s78, 0
      %s81 = sadd.s32 %s80, 1
      %s82 = scalar_select %p79, %s80, %s81
      %p85 = pneg %p79
      %p86 = scmp.eq.s32.totalorder %s18, 3
      %p87 = por %p85, %p86
      %p88 = scmp.ne.s32.totalorder %s80, %s83
      %p89 = scmp.eq.s32.totalorder %s18, 0
      %p90 = por %p88, %p89
      %p91 = scmp.ne.s32.totalorder %s80, %s83
      %p92 = scmp.eq.s32.totalorder %s23, 3
      %p93 = por %p91, %p92
      %p94 = scmp.ne.s32.totalorder %s83, %s84
      %p95 = scmp.eq.s32.totalorder %s23, 0
      %p96 = por %p94, %p95
      %p97 = scmp.ne.s32.totalorder %s83, %s84
      %p98 = scmp.eq.s32.totalorder %s24, 3
      %p99 = por %p97, %p98
      %p101 = scmp.ne.s32.totalorder %s84, %s100
      %p102 = scmp.eq.s32.totalorder %s24, 0
      %p103 = por %p101, %p102
      %s104 = ssub.s32 %s18, %s25
      %p105 = scmp.eq.s32.totalorder %s104, 0
      %s107 = sadd.s32 %s106, 1
      %s108 = scalar_select %p105, %s106, %s107
      %p111 = pneg %p105
      %p112 = scmp.eq.s32.totalorder %s18, 3
      %p113 = por %p111, %p112
      %p114 = scmp.ne.s32.totalorder %s106, %s109
      %p115 = scmp.eq.s32.totalorder %s18, 0
      %p116 = por %p114, %p115
      %p117 = scmp.ne.s32.totalorder %s106, %s109
      %p118 = scmp.eq.s32.totalorder %s23, 3
      %p119 = por %p117, %p118
      %p120 = scmp.ne.s32.totalorder %s109, %s110
      %p121 = scmp.eq.s32.totalorder %s23, 0
      %p122 = por %p120, %p121
      %p123 = scmp.ne.s32.totalorder %s109, %s110
      %p124 = scmp.eq.s32.totalorder %s24, 3
      %p125 = por %p123, %p124
      %p127 = scmp.ne.s32.totalorder %s110, %s126
      %p128 = scmp.eq.s32.totalorder %s24, 0
      %p129 = por %p127, %p128
      %p130 = scmp.le.s32.totalorder 1, %s18
      %p131 = scmp.lt.s32.totalorder %s18, 5
      %p132 = pnand %p130, %p131
      %p133 = pneg %p132
      // Predicated region
      $region9: #{tpu_custom_call.1} parent=5 // pred_check
        _
      $region10: #{tpu_custom_call.1} parent=5 // pred_check_branch
        %135 = sbr.rel (%p132) target = $region12
      $region11: #{tpu_custom_call.1} parent=5 // pred_region
        %s136 = ssub.s32 %s18, 1
      $region12: #{tpu_custom_call.1} parent=5 // pred_fallthru
        _
      %p137 = scmp.lt.s32.totalorder %s18, 4
      // Predicated region
      $region13: #{tpu_custom_call.1} parent=5 // pred_check
        %p138 = pneg %p137
      $region14: #{tpu_custom_call.1} parent=5 // pred_check_branch
        %140 = sbr.rel (%p138) target = $region16
      $region15: #{tpu_custom_call.1} parent=5 // pred_region
        // Predicated region
        $region17: #{tpu_custom_call.1} parent=15 // pred_check
          %p141 = pneg %p38
        $region18: #{tpu_custom_call.1} parent=15 // pred_check_branch
          %143 = sbr.rel (%p141) target = $region20
        $region19: #{tpu_custom_call.1} parent=15 // pred_region
          %s144 = sand.u32 %s28, 1
          %s145 = scalar_lea.sflag [#allocation3], %s144
          %s146 = sand.u32 %s28, 1
          %s147 = smul.addr %s146, 16
          %s148 = scalar_lea.vmem [#allocation2], %s147
          %s149 = smul.u32 2, %s18
          %s151 = ssub.s32 256, 256
          %152 = vsyncadd %s145, %s151
          %s153 = smul.addr %s149, 128
          %s154 = scalar_lea.hbm %s0, %s153
          %s155 = sshll.u32 %s148, 4
          %s156 = int_to_ptr.vmem [resolvable:$true] %s155
          %161 = dma.hbm_to_vmem [thread:$0]  %s154, 256, %s156, %s145, 128, 128, 8
        $region20: #{tpu_custom_call.1} parent=15 // pred_fallthru
          _
        // Predicated region
        $region21: #{tpu_custom_call.1} parent=15 // pred_check
          %p162 = pneg %p64
        $region22: #{tpu_custom_call.1} parent=15 // pred_check_branch
          %164 = sbr.rel (%p162) target = $region24
        $region23: #{tpu_custom_call.1} parent=15 // pred_region
          %s165 = sand.u32 %s18, 1
          %s166 = scalar_lea.sflag [#allocation6], %s165
          %s167 = sand.u32 %s54, 1
          %s168 = smul.addr %s167, 16
          %s169 = scalar_lea.vmem [#allocation5], %s168
          %s170 = smul.u32 2, %s18
          %s172 = ssub.s32 256, 256
          %173 = vsyncadd %s166, %s172
          %s174 = smul.addr %s170, 128
          %s175 = scalar_lea.hbm %s1, %s174
          %s176 = sshll.u32 %s169, 4
          %s177 = int_to_ptr.vmem [resolvable:$true] %s176
          %182 = dma.hbm_to_vmem [thread:$0]  %s175, 256, %s177, %s166, 128, 128, 8
        $region24: #{tpu_custom_call.1} parent=15 // pred_fallthru
          _
        // Predicated region
        $region25: #{tpu_custom_call.1} parent=15 // pred_check
          %p183 = pneg %p90
        $region26: #{tpu_custom_call.1} parent=15 // pred_check_branch
          %185 = sbr.rel (%p183) target = $region28
        $region27: #{tpu_custom_call.1} parent=15 // pred_region
          %s186 = sand.u32 %s18, 1
          %s187 = scalar_lea.sflag [#allocation6], %s186
          %s188 = sand.u32 %s80, 1
          %s189 = smul.addr %s188, 16
          %s190 = scalar_lea.vmem [#allocation7], %s189
          %s191 = smul.u32 2, %s18
          %s193 = ssub.s32 256, 256
          %194 = vsyncadd %s187, %s193
          %s195 = smul.addr %s191, 128
          %s196 = scalar_lea.hbm %s2, %s195
          %s197 = sshll.u32 %s190, 4
          %s198 = int_to_ptr.vmem [resolvable:$true] %s197
          %203 = dma.hbm_to_vmem [thread:$0]  %s196, 256, %s198, %s187, 128, 128, 8
        $region28: #{tpu_custom_call.1} parent=15 // pred_fallthru
          _
      $region16: #{tpu_custom_call.1} parent=5 // pred_fallthru
        _
      %p204 = scmp.le.s32.totalorder 1, %s18
      %p205 = scmp.lt.s32.totalorder %s18, 5
      %p206 = pnand %p204, %p205
      %p207 = pneg %p206
      // Predicated region
      $region29: #{tpu_custom_call.1} parent=5 // pred_check
        _
      $region30: #{tpu_custom_call.1} parent=5 // pred_check_branch
        %209 = sbr.rel (%p206) target = $region32
      $region31: #{tpu_custom_call.1} parent=5 // pred_region
        %s210 = ssub.s32 %s18, 1
        %s211 = sand.u32 %s31, 1
        %s212 = scalar_lea.sflag [#allocation3], %s211
        %s213 = sand.u32 %s31, 1
        %s214 = smul.addr %s213, 16
        %s215 = scalar_lea.vmem [#allocation2], %s214
        // Predicated region
        $region33: #{tpu_custom_call.1} parent=31 // pred_check
          %p216 = pneg %p44
        $region34: #{tpu_custom_call.1} parent=31 // pred_check_branch
          %218 = sbr.rel (%p216) target = $region36
        $region35: #{tpu_custom_call.1} parent=31 // pred_region
          %219 = dma.done %s212, 256
        $region36: #{tpu_custom_call.1} parent=31 // pred_fallthru
          _
        %s220 = sand.u32 %s23, 1
        %s221 = scalar_lea.sflag [#allocation6], %s220
        %s222 = sand.u32 %s57, 1
        %s223 = smul.addr %s222, 16
        %s224 = scalar_lea.vmem [#allocation5], %s223
        // Predicated region
        $region37: #{tpu_custom_call.1} parent=31 // pred_check
          %p225 = pneg %p70
        $region38: #{tpu_custom_call.1} parent=31 // pred_check_branch
          %227 = sbr.rel (%p225) target = $region40
        $region39: #{tpu_custom_call.1} parent=31 // pred_region
          %228 = dma.done %s221, 256
        $region40: #{tpu_custom_call.1} parent=31 // pred_fallthru
          _
        %s229 = sand.u32 %s23, 1
        %s230 = scalar_lea.sflag [#allocation6], %s229
        %s231 = sand.u32 %s83, 1
        %s232 = smul.addr %s231, 16
        %s233 = scalar_lea.vmem [#allocation7], %s232
        // Predicated region
        $region41: #{tpu_custom_call.1} parent=31 // pred_check
          %p234 = pneg %p96
        $region42: #{tpu_custom_call.1} parent=31 // pred_check_branch
          %236 = sbr.rel (%p234) target = $region44
        $region43: #{tpu_custom_call.1} parent=31 // pred_region
          %237 = dma.done %s230, 256
        $region44: #{tpu_custom_call.1} parent=31 // pred_fallthru
          _
        %s238 = sand.u32 %s31, 1
        %s239 = scalar_lea.sflag [#allocation3], %s238
        %s240 = sand.u32 %s31, 1
        %s241 = smul.addr %s240, 16
        %s242 = scalar_lea.vmem [#allocation2], %s241
        %p243 = pneg %p44
        %p244 = pneg %p41
        %s245 = sand.u32 %s23, 1
        %s246 = scalar_lea.sflag [#allocation6], %s245
        %s247 = sand.u32 %s57, 1
        %s248 = smul.addr %s247, 16
        %s249 = scalar_lea.vmem [#allocation5], %s248
        %p250 = pneg %p70
        %p251 = pneg %p67
        %s252 = sand.u32 %s23, 1
        %s253 = scalar_lea.sflag [#allocation6], %s252
        %s254 = sand.u32 %s83, 1
        %s255 = smul.addr %s254, 16
        %s256 = scalar_lea.vmem [#allocation7], %s255
        %p257 = pneg %p96
        %p258 = pneg %p93
        %p259 = pneg %p122
        %p260 = pneg %p119
        %s261 = sand.u32 %s109, 1
        %s262 = scalar_lea.sflag [#allocation4], %s261
        %s263 = sand.u32 %s109, 1
        %s264 = smul.addr %s263, 16
        %s265 = scalar_lea.vmem [#allocation8], %s264
        %s266 = smul.u32 2, %s23
        %s267 = smul.u32 2, %s23
        %s268 = smul.u32 2, %s23
        %s269 = smul.u32 2, %s23
        %v271 = vld [vmem:[%s215] sm:$0xff]
        %v272 = vld [vmem:[%s215 + $0x8] sm:$0xff]
        %v273 = vld [vmem:[%s224] sm:$0xff]
        %v274 = vld [vmem:[%s224 + $0x8] sm:$0xff]
        %v275 = vld [vmem:[%s233] sm:$0xff]
        %v276 = vld [vmem:[%s233 + $0x8] sm:$0xff]
        %v277 = vmul.f32 %v271, 0.17677669
        %v278 = vmul.f32 %v272, 0.17677669
        %v279 = vpack.c.bf16 %v277, %v277
        %v280 = vpack.c.bf16 %v278, %v278
        %v281 = vpack.c.bf16 %v273, %v273
        %v282 = vpack.c.bf16 %v274, %v274
        %vm283 = vcmask 261120
        %v285 = vsel %vm283, %v279, 0
        %v288 = vsel %vm283, %v281, 0
        %290 = vmatprep.subr.bf16.mxu0 0
        %291 = vmatpush1.bf16.xpose.msra.mxu0 %v288
        %292 = vmatprep.subr.bf16.mxu0 0
        %293 = vmatpush1.bf16.xpose.msra.mxu0 0
        %294 = vmatprep.subr.bf16.mxu0 0
        %295 = vmatpush1.bf16.xpose.msra.mxu0 0
        %296 = vmatprep.subr.bf16.mxu0 0
        %297 = vmatpush1.bf16.xpose.msra.mxu0 0
        %298 = vmatprep.subr.bf16.mxu0 0
        %299 = vmatpush1.bf16.xpose.msra.mxu0 0
        %300 = vmatprep.subr.bf16.mxu0 0
        %301 = vmatpush1.bf16.xpose.msra.mxu0 0
        %302 = vmatprep.subr.bf16.mxu0 0
        %303 = vmatpush1.bf16.xpose.msra.mxu0 0
        %304 = vmatprep.subr.bf16.mxu0 0
        %305 = vmatpush1.bf16.xpose.msra.mxu0 0
        %306 = vmatprep.subr.bf16.mxu0 0
        %307 = vmatpush1.bf16.xpose.msra.mxu0 0
        %308 = vmatprep.subr.bf16.mxu0 0
        %309 = vmatpush1.bf16.xpose.msra.mxu0 0
        %310 = vmatprep.subr.bf16.mxu0 0
        %311 = vmatpush1.bf16.xpose.msra.mxu0 0
        %312 = vmatprep.subr.bf16.mxu0 0
        %313 = vmatpush1.bf16.xpose.msra.mxu0 0
        %314 = vmatprep.subr.bf16.mxu0 0
        %315 = vmatpush1.bf16.xpose.msra.mxu0 0
        %316 = vmatprep.subr.bf16.mxu0 0
        %317 = vmatpush1.bf16.xpose.msra.mxu0 0
        %318 = vmatprep.subr.bf16.mxu0 0
        %319 = vmatpush1.bf16.xpose.msra.mxu0 0
        %320 = vmatprep.subr.bf16.mxu0 0
        %321 = vmatpush1.bf16.xpose.msra.mxu0 0
        %322 = vmatprep.mubr.bf16.mxu0 0
        %323 = vmatmul.mubr.bf16.gmra.mrb[0].mxu0 %v285
        %v324 = vpop.f32.mrb[0].mxu0
        %v325 = vadd.f32 0.0, %v324
        %v326 = vpop.f32.mrb[0].mxu0
        %v327 = vpop.f32.mrb[0].mxu0
        %v328 = vpop.f32.mrb[0].mxu0
        %329 = vdwg.mxu0
        %v331 = vsel %vm283, %v280, 0
        %v334 = vsel %vm283, %v282, 0
        %336 = vmatprep.subr.bf16.mxu0 0
        %337 = vmatpush1.bf16.xpose.msra.mxu0 %v334
        %338 = vmatprep.subr.bf16.mxu0 0
        %339 = vmatpush1.bf16.xpose.msra.mxu0 0
        %340 = vmatprep.subr.bf16.mxu0 0
        %341 = vmatpush1.bf16.xpose.msra.mxu0 0
        %342 = vmatprep.subr.bf16.mxu0 0
        %343 = vmatpush1.bf16.xpose.msra.mxu0 0
        %344 = vmatprep.subr.bf16.mxu0 0
        %345 = vmatpush1.bf16.xpose.msra.mxu0 0
        %346 = vmatprep.subr.bf16.mxu0 0
        %347 = vmatpush1.bf16.xpose.msra.mxu0 0
        %348 = vmatprep.subr.bf16.mxu0 0
        %349 = vmatpush1.bf16.xpose.msra.mxu0 0
        %350 = vmatprep.subr.bf16.mxu0 0
        %351 = vmatpush1.bf16.xpose.msra.mxu0 0
        %352 = vmatprep.subr.bf16.mxu0 0
        %353 = vmatpush1.bf16.xpose.msra.mxu0 0
        %354 = vmatprep.subr.bf16.mxu0 0
        %355 = vmatpush1.bf16.xpose.msra.mxu0 0
        %356 = vmatprep.subr.bf16.mxu0 0
        %357 = vmatpush1.bf16.xpose.msra.mxu0 0
        %358 = vmatprep.subr.bf16.mxu0 0
        %359 = vmatpush1.bf16.xpose.msra.mxu0 0
        %360 = vmatprep.subr.bf16.mxu0 0
        %361 = vmatpush1.bf16.xpose.msra.mxu0 0
        %362 = vmatprep.subr.bf16.mxu0 0
        %363 = vmatpush1.bf16.xpose.msra.mxu0 0
        %364 = vmatprep.subr.bf16.mxu0 0
        %365 = vmatpush1.bf16.xpose.msra.mxu0 0
        %366 = vmatprep.subr.bf16.mxu0 0
        %367 = vmatpush1.bf16.xpose.msra.mxu0 0
        %368 = vmatprep.mubr.bf16.mxu0 0
        %369 = vmatmul.mubr.bf16.gmra.mrb[0].mxu0 %v331
        %v370 = vpop.f32.mrb[0].mxu0
        %v371 = vadd.f32 0.0, %v370
        %v372 = vpop.f32.mrb[0].mxu0
        %v373 = vpop.f32.mrb[0].mxu0
        %v374 = vpop.f32.mrb[0].mxu0
        %375 = vdwg.mxu0
        %vm376 = vcmask 64512
        %v377 = vsel %vm376, %v325, -inf
        %378 = vmax.xlane.f32.xlu0 %v377
        %v379 = vpop.xlane.xlu0 %378
        %v380 = vsel %vm376, %v371, -inf
        %381 = vmax.xlane.f32.xlu0 %v380
        %v382 = vpop.xlane.xlu0 %381
        %v383 = vsub.f32 %v325, %v379
        %v384 = vsub.f32 %v371, %v382
        %v385 = vmul.f32 %v383, 1.442695
        %v386 = vpow.pop %v385
        %v387 = vmul.f32 %v384, 1.442695
        %v388 = vpow.pop %v387
        %v389 = vsel %vm376, %v386, 0.0
        %390 = vadd.xlane.f32.xlu0 %v389
        %v391 = vpop.xlane.xlu0 %390
        %v392 = vsel %vm376, %v388, 0.0
        %393 = vadd.xlane.f32.xlu0 %v392
        %v394 = vpop.xlane.xlu0 %393
        %v395 = vpack.c.bf16 %v386, %v386
        %v396 = vpack.c.bf16 %v388, %v388
        %v397 = vpack.c.bf16 %v275, %v275
        %v398 = vpack.c.bf16 %v276, %v276
        %v400 = vsel %vm376, %v395, 0
        %vm402 = vcmask 1043456
        %v404 = vsel %vm402, %v397, 0
        %406 = vmatprep.subr.bf16.mxu0 0
        %407 = vmatpush1.bf16.msra.mxu0 %v404
        %408 = vmatprep.subr.bf16.mxu0 0
        %409 = vmatpush1.bf16.msra.mxu0 0
        %410 = vmatprep.subr.bf16.mxu0 0
        %411 = vmatpush1.bf16.msra.mxu0 0
        %412 = vmatprep.subr.bf16.mxu0 0
        %413 = vmatpush1.bf16.msra.mxu0 0
        %414 = vmatprep.subr.bf16.mxu0 0
        %415 = vmatpush1.bf16.msra.mxu0 0
        %416 = vmatprep.subr.bf16.mxu0 0
        %417 = vmatpush1.bf16.msra.mxu0 0
        %418 = vmatprep.subr.bf16.mxu0 0
        %419 = vmatpush1.bf16.msra.mxu0 0
        %420 = vmatprep.subr.bf16.mxu0 0
        %421 = vmatpush1.bf16.msra.mxu0 0
        %422 = vmatprep.subr.bf16.mxu0 0
        %423 = vmatpush1.bf16.msra.mxu0 0
        %424 = vmatprep.subr.bf16.mxu0 0
        %425 = vmatpush1.bf16.msra.mxu0 0
        %426 = vmatprep.subr.bf16.mxu0 0
        %427 = vmatpush1.bf16.msra.mxu0 0
        %428 = vmatprep.subr.bf16.mxu0 0
        %429 = vmatpush1.bf16.msra.mxu0 0
        %430 = vmatprep.subr.bf16.mxu0 0
        %431 = vmatpush1.bf16.msra.mxu0 0
        %432 = vmatprep.subr.bf16.mxu0 0
        %433 = vmatpush1.bf16.msra.mxu0 0
        %434 = vmatprep.subr.bf16.mxu0 0
        %435 = vmatpush1.bf16.msra.mxu0 0
        %436 = vmatprep.subr.bf16.mxu0 0
        %437 = vmatpush1.bf16.msra.mxu0 0
        %438 = vmatprep.mubr.bf16.mxu0 0
        %439 = vmatmul.mubr.bf16.gmra.mrb[0].mxu0 %v400
        %v440 = vpop.f32.mrb[0].mxu0
        %v441 = vadd.f32 0.0, %v440
        %v442 = vpop.f32.mrb[0].mxu0
        %v443 = vpop.f32.mrb[0].mxu0
        %v444 = vpop.f32.mrb[0].mxu0
        %445 = vdwg.mxu0
        %v447 = vsel %vm376, %v396, 0
        %v450 = vsel %vm402, %v398, 0
        %452 = vmatprep.subr.bf16.mxu0 0
        %453 = vmatpush1.bf16.msra.mxu0 %v450
        %454 = vmatprep.subr.bf16.mxu0 0
        %455 = vmatpush1.bf16.msra.mxu0 0
        %456 = vmatprep.subr.bf16.mxu0 0
        %457 = vmatpush1.bf16.msra.mxu0 0
        %458 = vmatprep.subr.bf16.mxu0 0
        %459 = vmatpush1.bf16.msra.mxu0 0
        %460 = vmatprep.subr.bf16.mxu0 0
        %461 = vmatpush1.bf16.msra.mxu0 0
        %462 = vmatprep.subr.bf16.mxu0 0
        %463 = vmatpush1.bf16.msra.mxu0 0
        %464 = vmatprep.subr.bf16.mxu0 0
        %465 = vmatpush1.bf16.msra.mxu0 0
        %466 = vmatprep.subr.bf16.mxu0 0
        %467 = vmatpush1.bf16.msra.mxu0 0
        %468 = vmatprep.subr.bf16.mxu0 0
        %469 = vmatpush1.bf16.msra.mxu0 0
        %470 = vmatprep.subr.bf16.mxu0 0
        %471 = vmatpush1.bf16.msra.mxu0 0
        %472 = vmatprep.subr.bf16.mxu0 0
        %473 = vmatpush1.bf16.msra.mxu0 0
        %474 = vmatprep.subr.bf16.mxu0 0
        %475 = vmatpush1.bf16.msra.mxu0 0
        %476 = vmatprep.subr.bf16.mxu0 0
        %477 = vmatpush1.bf16.msra.mxu0 0
        %478 = vmatprep.subr.bf16.mxu0 0
        %479 = vmatpush1.bf16.msra.mxu0 0
        %480 = vmatprep.subr.bf16.mxu0 0
        %481 = vmatpush1.bf16.msra.mxu0 0
        %482 = vmatprep.subr.bf16.mxu0 0
        %483 = vmatpush1.bf16.msra.mxu0 0
        %484 = vmatprep.mubr.bf16.mxu0 0
        %485 = vmatmul.mubr.bf16.gmra.mrb[0].mxu0 %v447
        %v486 = vpop.f32.mrb[0].mxu0
        %v487 = vadd.f32 0.0, %v486
        %v488 = vpop.f32.mrb[0].mxu0
        %v489 = vpop.f32.mrb[0].mxu0
        %v490 = vpop.f32.mrb[0].mxu0
        %491 = vdwg.mxu0
        %v492 = vrcp.pop %v391
        %v493 = vrcp.pop %v394
        %v494 = vmul.f32 %v441, %v492
        %v495 = vmul.f32 %v487, %v493
        %496 = vst.msk [vmem:[%s265] sm:$0xff] %vm283, %v494
        %497 = vst.msk [vmem:[%s265 + $0x8] sm:$0xff] %vm283, %v495
        %s498 = sand.u32 %s109, 1
        %s499 = scalar_lea.sflag [#allocation4], %s498
        %s500 = sand.u32 %s109, 1
        %s501 = smul.addr %s500, 16
        %s502 = scalar_lea.vmem [#allocation8], %s501
        // Predicated region
        $region45: #{tpu_custom_call.1} parent=31 // pred_check
          %p503 = pneg %p119
        $region46: #{tpu_custom_call.1} parent=31 // pred_check_branch
          %505 = sbr.rel (%p503) target = $region48
        $region47: #{tpu_custom_call.1} parent=31 // pred_region
          %s506 = smul.u32 2, %s23
          %s508 = ssub.s32 256, 256
          %509 = vsyncadd %s499, %s508
          %s510 = smul.addr %s506, 128
          %s511 = scalar_lea.hbm %s3, %s510
          %s512 = sshll.u32 %s502, 4
          %s513 = int_to_ptr.vmem [resolvable:$true] %s512
          %518 = dma.vmem_to_hbm [thread:$0]  %s513, 256, %s511, %s499, 128, 128, 8
        $region48: #{tpu_custom_call.1} parent=31 // pred_fallthru
          _
      $region32: #{tpu_custom_call.1} parent=5 // pred_fallthru
        _
      %p519 = scmp.le.s32.totalorder 2, %s18
      // Predicated region
      $region49: #{tpu_custom_call.1} parent=5 // pred_check
        %p520 = pneg %p519
      $region50: #{tpu_custom_call.1} parent=5 // pred_check_branch
        %522 = sbr.rel (%p520) target = $region52
      $region51: #{tpu_custom_call.1} parent=5 // pred_region
        %s523 = ssub.s32 %s18, 2
        // Predicated region
        $region53: #{tpu_custom_call.1} parent=51 // pred_check
          %p524 = pneg %p125
        $region54: #{tpu_custom_call.1} parent=51 // pred_check_branch
          %526 = sbr.rel (%p524) target = $region56
        $region55: #{tpu_custom_call.1} parent=51 // pred_region
          %s527 = sand.u32 %s110, 1
          %s528 = scalar_lea.sflag [#allocation4], %s527
          %s529 = sand.u32 %s110, 1
          %s530 = smul.addr %s529, 16
          %s531 = scalar_lea.vmem [#allocation8], %s530
          %532 = dma.done %s528, 256
        $region56: #{tpu_custom_call.1} parent=51 // pred_fallthru
          _
      $region52: #{tpu_custom_call.1} parent=5 // pred_fallthru
        _
    $region6: #{tpu_custom_call.1} parent=1 // loop_footer
      %s22 = sadd.s32 1, %s18
    $region7: #{tpu_custom_call.1} parent=1 // loop_footer_branch
      %17 = sbr.rel target = $region3
    $region8: #{tpu_custom_call.1} parent=1 // loop_exit
      _
    %533 = vsyncpa [#allocation3], 1
    %s534 = scalar_lea.sflag [#allocation3], 1
    %535 = vsyncpa %s534, 1
    %536 = vsyncpa [#allocation6], 1
    %s537 = scalar_lea.sflag [#allocation6], 1
    %538 = vsyncpa %s537, 1
    %539 = vsyncpa [#allocation4], 1
    %s540 = scalar_lea.sflag [#allocation4], 1
    %541 = vsyncpa %s540, 1

</llo_original>
